<compile_context>
chip_gen: v7x
topology: tpu7x:2x2x1
jax: 0.10.0
libtpu: 0.0.40
codegen_flags: <defaults>
</compile_context>

<pallas_src>
import functools

import jax
import jax.numpy as jnp
from jax.experimental import pallas as pl
from jax.experimental.pallas import tpu as pltpu


def _round_up(a: int, b: int) -> int:
    return (a + b - 1) // b * b


def _residual_block_kernel(x_ref, w_ref, p_ref, o_ref, *, true_d: int):
    # MXU matmul: operands in the weight dtype (bf16 by default), f32 accumulate.
    xm = x_ref[...].astype(w_ref.dtype)                       # (tm, Dp)
    h = jnp.dot(xm, w_ref[...], preferred_element_type=jnp.float32)
    h = h + p_ref[0:1, :]                                      # bias (0 on padded lanes)

    # Two-pass LayerNorm over the true feature count.  On the padded-feature
    # path, h/bias/gamma/beta are exactly 0 on padded lanes; the centered value
    # is re-masked so padded lanes stay out of the variance and of the output.
    dp = x_ref.shape[-1]
    inv_d = 1.0 / float(true_d)
    mean = jnp.sum(h, axis=-1, keepdims=True) * inv_d
    c = h - mean
    if true_d != dp:                                           # static branch
        lane = jax.lax.broadcasted_iota(jnp.int32, c.shape, 1)
        c = jnp.where(lane < true_d, c, 0.0)
    var = jnp.sum(c * c, axis=-1, keepdims=True) * inv_d
    hn = c * jax.lax.rsqrt(var + 1e-5)                         # torch LayerNorm eps
    hn = hn * p_ref[1:2, :] + p_ref[2:3, :]                    # gamma/beta

    # SiLU; padded lanes stay exactly 0 (0 * sigmoid(0) = 0).
    act = hn * jax.nn.sigmoid(hn)

    # Residual add: re-read x (short live range across the matmul / LN).
    o_ref[...] = (x_ref[...].astype(jnp.float32) + act).astype(o_ref.dtype)


def _choose_tiling(n_rows, dp, x_bytes, out_bytes, w_bytes, p_bytes):
    """Pick (tm, vmem_limit_bytes) from the chip's VMEM capacity."""
    try:
        vmem_cap = pltpu.get_tpu_info().vmem_capacity_bytes    # 128 MiB v5e/v6e, 64 MiB v7x
    except Exception:
        vmem_cap = 128 << 20
    vmem_limit = (vmem_cap * 3) // 4                           # ~96 MiB v5e/v6e, ~48 MiB v7x

    # Per-row footprint: double-buffered input + output tiles, plus ~3 f32
    # intermediates (h / centered / act) that live per tile.
    per_row = 2 * dp * x_bytes + 2 * dp * out_bytes + 3 * dp * 4
    # ~65% of the scoped limit for tiles/temporaries; residents come out first
    # (extra p_bytes headroom covers the double-buffer fallback for params).
    budget = (vmem_limit * 13) // 20 - w_bytes - 2 * p_bytes

    # Sublane-packing minimum for the streamed blocks.
    io_min_bytes = min(x_bytes, out_bytes)
    row_min = 8 if io_min_bytes >= 4 else (16 if io_min_bytes == 2 else 32)

    tm = 1024
    while tm > row_min and tm * per_row > budget:
        tm //= 2
    # Prefer >= 4 row steps (>= 2 per v7x TensorCore) so the BlockSpec pipeline
    # overlaps DMA with compute on both cores, but never drop below the
    # MXU-friendly 256 rows just to create extra steps.
    while tm > 256 and pl.cdiv(max(n_rows, 1), tm) < 4:
        tm //= 2
    return max(tm, row_min), int(vmem_limit)


def pack_residual_block_params(weight, bias, gamma, beta, *, matmul_dtype=jnp.bfloat16):
    """One-time weight prep (hoist out of the per-forward path).

    weight: (D, D) torch Linear layout (out, in).  Returns (w_t, params, D):
    w_t is W^T zero-padded to (Dp, Dp) in matmul_dtype; params is an (8, Dp)
    f32 block packing bias/gamma/beta (padded lanes zero)."""
    d = weight.shape[0]
    dp = _round_up(d, 128)
    w_t = jnp.pad(weight.T, ((0, dp - d), (0, dp - d))).astype(matmul_dtype)
    params = jnp.pad(
        jnp.stack([bias, gamma, beta], axis=0).astype(jnp.float32),
        ((0, 5), (0, dp - d)),
    )
    return w_t, params, d


def residual_block_packed(x, w_t, params, true_d):
    """x: (..., D) with D == true_d; w_t/params from pack_residual_block_params."""
    orig_shape = x.shape
    d = orig_shape[-1]
    assert d == true_d, "feature dim mismatch with packed params"
    dp = w_t.shape[0]

    x2 = x.reshape(-1, d)
    n = x2.shape[0]

    # Fast path: feature dim already lane-dense -> no pad / unpad HBM copies.
    x_in = x2 if dp == d else jnp.pad(x2, ((0, 0), (0, dp - d)))

    out_dtype = x.dtype
    x_bytes = jnp.dtype(x.dtype).itemsize
    out_bytes = jnp.dtype(out_dtype).itemsize
    w_bytes = dp * dp * jnp.dtype(w_t.dtype).itemsize
    p_bytes = int(params.size) * 4

    tm, vmem_limit = _choose_tiling(n, dp, x_bytes, out_bytes, w_bytes, p_bytes)
    # Small row counts: one full-extent row block (exempt from the sublane-
    # multiple rule, no wasted MXU rows, nothing to pipeline anyway).
    if n <= tm:
        tm = n

    # Resident-weight path only (fine for VAE-sized D).
    # TODO(synk): add a K-tiled accumulator path (extra "arbitrary" grid axis +
    # f32 VMEM scratch) once D*D*itemsize exceeds ~half the scoped VMEM limit.
    if w_bytes > vmem_limit // 2:
        raise ValueError("feature dim too large for the resident-weight path")

    grid = (pl.cdiv(n, tm),)
    cost = pl.CostEstimate(
        flops=2 * n * dp * dp + 10 * n * dp,
        transcendentals=n * dp,
        bytes_accessed=n * dp * (x_bytes + out_bytes) + w_bytes + p_bytes,
    )

    def build(single_buffer_resident):
        if single_buffer_resident:
            # Resident blocks never change across the grid: single-buffer them.
            w_spec = pl.BlockSpec((dp, dp), lambda i: (0, 0),
                                  pipeline_mode=pl.Buffered(1))
            p_spec = pl.BlockSpec((8, dp), lambda i: (0, 0),
                                  pipeline_mode=pl.Buffered(1))
        else:
            w_spec = pl.BlockSpec((dp, dp), lambda i: (0, 0))
            p_spec = pl.BlockSpec((8, dp), lambda i: (0, 0))
        return pl.pallas_call(
            functools.partial(_residual_block_kernel, true_d=d),
            out_shape=jax.ShapeDtypeStruct((n, dp), out_dtype),
            grid_spec=pltpu.PrefetchScalarGridSpec(
                num_scalar_prefetch=0,
                grid=grid,
                in_specs=[
                    pl.BlockSpec((tm, dp), lambda i: (i, 0)),   # x row tile (pipelined)
                    w_spec,                                     # W^T (resident)
                    p_spec,                                     # packed bias/gamma/beta
                ],
                out_specs=pl.BlockSpec((tm, dp), lambda i: (i, 0)),
            ),
            compiler_params=pltpu.CompilerParams(
                dimension_semantics=("parallel",),
                vmem_limit_bytes=vmem_limit,
            ),
            cost_estimate=cost,
        )

    try:
        out = build(True)(x_in, w_t, params)
    except Exception:
        # pipeline_mode / Buffered(1) not supported on this JAX: default buffering.
        out = build(False)(x_in, w_t, params)

    if dp != d:
        out = out[:, :d]
    return out.reshape(orig_shape)


def residual_block(x, weight, bias, gamma, beta, *, matmul_dtype=jnp.bfloat16):
    """Convenience entry: x + SiLU(LayerNorm(x @ weight.T + bias)).
    For repeated calls with the same weights, hoist pack_residual_block_params."""
    w_t, params, d = pack_residual_block_params(
        weight, bias, gamma, beta, matmul_dtype=matmul_dtype)
    return residual_block_packed(x, w_t, params, d)


def residual_block_ref(x, weight, bias, gamma, beta):
    h = x @ weight.T + bias
    mean = jnp.mean(h, axis=-1, keepdims=True)
    var = jnp.mean((h - mean) ** 2, axis=-1, keepdims=True)
    hn = (h - mean) / jnp.sqrt(var + 1e-5)
    hn = hn * gamma + beta
    return x + hn * jax.nn.sigmoid(hn)


if __name__ == "__main__":
    key = jax.random.PRNGKey(0)
    k1, k2, k3, k4, k5, k6 = jax.random.split(key, 6)

    # --- Case 1: D not a multiple of 128 (padded-feature path), strict f32 MXU ---
    dim, batch = 32, 8
    x = jax.random.normal(k1, (batch, dim), dtype=jnp.float32)
    bound = 1.0 / (dim ** 0.5)
    weight = jax.random.uniform(k2, (dim, dim), jnp.float32, -bound, bound)
    bias = jax.random.uniform(k3, (dim,), jnp.float32, -bound, bound)
    gamma = jnp.ones((dim,), jnp.float32)
    beta = jnp.zeros((dim,), jnp.float32)

    ref1 = residual_block_ref(x, weight, bias, gamma, beta)
    out1 = jax.block_until_ready(
        residual_block(x, weight, bias, gamma, beta, matmul_dtype=jnp.float32))
    assert out1.shape == (batch, dim)
    assert jnp.allclose(out1, ref1, atol=1e-4, rtol=1e-4)

    # --- Case 2: D multiple of 128 (no-pad fast path), bf16 MXU, f32 I/O ---
    dim2, batch2 = 128, 16
    x2 = jax.random.normal(k4, (batch2, dim2), dtype=jnp.float32)
    bound2 = 1.0 / (dim2 ** 0.5)
    w2 = jax.random.uniform(k5, (dim2, dim2), jnp.float32, -bound2, bound2)
    b2 = jax.random.uniform(k6, (dim2,), jnp.float32, -bound2, bound2)
    g2 = jnp.ones((dim2,), jnp.float32)
    be2 = jnp.zeros((dim2,), jnp.float32)

    packed = pack_residual_block_params(w2, b2, g2, be2)   # hoisted weight prep
    ref2 = residual_block_ref(x2, w2, b2, g2, be2)
    out2 = jax.block_until_ready(residual_block_packed(x2, *packed))
    assert out2.shape == (batch2, dim2)
    assert jnp.allclose(out2, ref2, atol=5e-2, rtol=5e-2)

    # --- Case 3: bf16 activations (bf16 streamed I/O) with the same packed weights ---
    x3 = x2.astype(jnp.bfloat16)
    ref3 = residual_block_ref(x3.astype(jnp.float32), w2, b2, g2, be2)
    out3 = jax.block_until_ready(residual_block_packed(x3, *packed))
    assert out3.dtype == jnp.bfloat16 and out3.shape == (batch2, dim2)
    assert jnp.allclose(out3.astype(jnp.float32), ref3, atol=6e-2, rtol=6e-2)

    print("KERNEL_OK")
</pallas_src>

<mosaic_0001>
module attributes {stable_mosaic.version = 11 : i64} {
  func.func @_residual_block_kernel(%arg0: i32, %arg1: memref<8x128xf32, #tpu.memory_space<vmem>>, %arg2: memref<128x128xf32, #tpu.memory_space<vmem>>, %arg3: memref<8x128xf32, #tpu.memory_space<vmem>>, %arg4: memref<8x128xf32, #tpu.memory_space<vmem>>) attributes {dimension_semantics = [#tpu.dimension_semantics<parallel>], iteration_bounds = array<i64: 1>, scalar_prefetch = 0 : i64, scratch_operands = 0 : i64, tpu.core_type = #tpu.core_type<tc>, window_params = [{transform_indices = @transform_0, window_bounds = array<i64: 8, 128>}, {pipeline_mode = #tpu.pipeline_mode<synchronous>, transform_indices = @transform_1, window_bounds = array<i64: 128, 128>}, {pipeline_mode = #tpu.pipeline_mode<synchronous>, transform_indices = @transform_2, window_bounds = array<i64: 8, 128>}, {transform_indices = @transform_3, window_bounds = array<i64: 8, 128>}]} {
    %c0 = arith.constant 0 : index
    %c0_0 = arith.constant 0 : index
    %0 = vector.load %arg1[%c0, %c0_0] : memref<8x128xf32, #tpu.memory_space<vmem>>, vector<8x128xf32>
    %c0_1 = arith.constant 0 : index
    %c0_2 = arith.constant 0 : index
    %1 = vector.load %arg2[%c0_1, %c0_2] : memref<128x128xf32, #tpu.memory_space<vmem>>, vector<128x128xf32>
    %cst = arith.constant dense<0.000000e+00> : vector<8x128xf32>
    %2 = tpu.matmul %0, %1, %cst {dimension_numbers = #tpu.dot_dimension_numbers<[1], [0], [0], [1], [0, 0, 1, 1], [], []>} : vector<8x128xf32>, vector<128x128xf32>, vector<8x128xf32> -> vector<8x128xf32>
    %c0_3 = arith.constant 0 : index
    %c0_4 = arith.constant 0 : index
    %3 = vector.load %arg3[%c0_3, %c0_4] : memref<8x128xf32, #tpu.memory_space<vmem>>, vector<1x128xf32>
    %4 = vector.broadcast %3 : vector<1x128xf32> to vector<8x128xf32>
    %5 = arith.addf %2, %4 : vector<8x128xf32>
    %cst_5 = arith.constant dense<0.000000e+00> : vector<8xf32>
    %6 = vector.multi_reduction <add>, %5, %cst_5 [1] : vector<8x128xf32> to vector<8xf32>
    %7 = vector.shape_cast %6 : vector<8xf32> to vector<8x1xf32>
    %cst_6 = arith.constant 3.125000e-02 : f32
    %8 = vector.broadcast %cst_6 : f32 to vector<8x1xf32>
    %9 = arith.mulf %7, %8 : vector<8x1xf32>
    %10 = vector.broadcast %9 : vector<8x1xf32> to vector<8x128xf32>
    %11 = arith.subf %5, %10 : vector<8x128xf32>
    %12 = tpu.iota {dimensions = array<i32: 1>} : vector<8x128xi32>
    %c32_i32 = arith.constant 32 : i32
    %13 = vector.broadcast %c32_i32 : i32 to vector<8x128xi32>
    %14 = arith.cmpi slt, %12, %13 : vector<8x128xi32>
    %cst_7 = arith.constant 0.000000e+00 : f32
    %15 = vector.broadcast %cst_7 : f32 to vector<8x128xf32>
    %16 = arith.select %14, %11, %15 : vector<8x128xi1>, vector<8x128xf32>
    %17 = arith.mulf %16, %16 : vector<8x128xf32>
    %cst_8 = arith.constant dense<0.000000e+00> : vector<8xf32>
    %18 = vector.multi_reduction <add>, %17, %cst_8 [1] : vector<8x128xf32> to vector<8xf32>
    %19 = vector.shape_cast %18 : vector<8xf32> to vector<8x1xf32>
    %cst_9 = arith.constant 3.125000e-02 : f32
    %20 = vector.broadcast %cst_9 : f32 to vector<8x1xf32>
    %21 = arith.mulf %19, %20 : vector<8x1xf32>
    %cst_10 = arith.constant 9.99999974E-6 : f32
    %22 = vector.broadcast %cst_10 : f32 to vector<8x1xf32>
    %23 = arith.addf %21, %22 : vector<8x1xf32>
    %24 = math.rsqrt %23 : vector<8x1xf32>
    %25 = vector.broadcast %24 : vector<8x1xf32> to vector<8x128xf32>
    %26 = arith.mulf %16, %25 : vector<8x128xf32>
    %c1 = arith.constant 1 : index
    %c0_11 = arith.constant 0 : index
    %27 = vector.load %arg3[%c1, %c0_11] : memref<8x128xf32, #tpu.memory_space<vmem>>, vector<1x128xf32>
    %28 = vector.broadcast %27 : vector<1x128xf32> to vector<8x128xf32>
    %29 = arith.mulf %26, %28 : vector<8x128xf32>
    %c2 = arith.constant 2 : index
    %c0_12 = arith.constant 0 : index
    %30 = vector.load %arg3[%c2, %c0_12] : memref<8x128xf32, #tpu.memory_space<vmem>>, vector<1x128xf32>
    %31 = vector.broadcast %30 : vector<1x128xf32> to vector<8x128xf32>
    %32 = arith.addf %29, %31 : vector<8x128xf32>
    %33 = arith.negf %32 : vector<8x128xf32>
    %34 = math.exp %33 : vector<8x128xf32>
    %cst_13 = arith.constant 1.000000e+00 : f32
    %35 = vector.broadcast %cst_13 : f32 to vector<8x128xf32>
    %36 = arith.addf %35, %34 : vector<8x128xf32>
    %37 = arith.divf %35, %36 : vector<8x128xf32>
    %38 = arith.mulf %32, %37 : vector<8x128xf32>
    %c0_14 = arith.constant 0 : index
    %c0_15 = arith.constant 0 : index
    %39 = vector.load %arg1[%c0_14, %c0_15] : memref<8x128xf32, #tpu.memory_space<vmem>>, vector<8x128xf32>
    %40 = arith.addf %39, %38 : vector<8x128xf32>
    %c0_16 = arith.constant 0 : index
    %c0_17 = arith.constant 0 : index
    %41 = vector.load %arg4[%c0_16, %c0_17] : memref<8x128xf32, #tpu.memory_space<vmem>>, vector<8x128xf32>
    tpu.vector_store %arg4[%c0_16, %c0_17], %40 {strides = array<i32>} : memref<8x128xf32, #tpu.memory_space<vmem>>, vector<8x128xf32>,
    return
  }
  func.func @transform_0(%arg0: i32) -> (i32, i32) {
    %c0_i32 = arith.constant 0 : i32
    %c0_i32_0 = arith.constant 0 : i32
    return %arg0, %c0_i32 : i32, i32
  }
  func.func @transform_1(%arg0: i32) -> (i32, i32) {
    %c0_i32 = arith.constant 0 : i32
    %c0_i32_0 = arith.constant 0 : i32
    %c0_i32_1 = arith.constant 0 : i32
    return %c0_i32, %c0_i32_0 : i32, i32
  }
  func.func @transform_2(%arg0: i32) -> (i32, i32) {
    %c0_i32 = arith.constant 0 : i32
    %c0_i32_0 = arith.constant 0 : i32
    %c0_i32_1 = arith.constant 0 : i32
    return %c0_i32, %c0_i32_0 : i32, i32
  }
  func.func @transform_3(%arg0: i32) -> (i32, i32) {
    %c0_i32 = arith.constant 0 : i32
    %c0_i32_0 = arith.constant 0 : i32
    return %arg0, %c0_i32 : i32, i32
  }
}

module attributes {stable_mosaic.version = 11 : i64} {
  func.func @_residual_block_kernel(%arg0: i32, %arg1: memref<8x128xf32, #tpu.memory_space<vmem>>, %arg2: memref<128x128xf32, #tpu.memory_space<vmem>>, %arg3: memref<8x128xf32, #tpu.memory_space<vmem>>, %arg4: memref<8x128xf32, #tpu.memory_space<vmem>>) attributes {dimension_semantics = [#tpu.dimension_semantics<parallel>], iteration_bounds = array<i64: 1>, scalar_prefetch = 0 : i64, scratch_operands = 0 : i64, tpu.core_type = #tpu.core_type<tc>, window_params = [{transform_indices = @transform_0, window_bounds = array<i64: 8, 128>}, {pipeline_mode = #tpu.pipeline_mode<synchronous>, transform_indices = @transform_1, window_bounds = array<i64: 128, 128>}, {pipeline_mode = #tpu.pipeline_mode<synchronous>, transform_indices = @transform_2, window_bounds = array<i64: 8, 128>}, {transform_indices = @transform_3, window_bounds = array<i64: 8, 128>}]} {
    %c0 = arith.constant 0 : index
    %c0_0 = arith.constant 0 : index
    %0 = vector.load %arg1[%c0, %c0_0] : memref<8x128xf32, #tpu.memory_space<vmem>>, vector<8x128xf32>
    %c0_1 = arith.constant 0 : index
    %c0_2 = arith.constant 0 : index
    %1 = vector.load %arg2[%c0_1, %c0_2] : memref<128x128xf32, #tpu.memory_space<vmem>>, vector<128x128xf32>
    %cst = arith.constant dense<0.000000e+00> : vector<8x128xf32>
    %2 = tpu.matmul %0, %1, %cst {dimension_numbers = #tpu.dot_dimension_numbers<[1], [0], [0], [1], [0, 0, 1, 1], [], []>} : vector<8x128xf32>, vector<128x128xf32>, vector<8x128xf32> -> vector<8x128xf32>
    %c0_3 = arith.constant 0 : index
    %c0_4 = arith.constant 0 : index
    %3 = vector.load %arg3[%c0_3, %c0_4] : memref<8x128xf32, #tpu.memory_space<vmem>>, vector<1x128xf32>
    %4 = vector.broadcast %3 : vector<1x128xf32> to vector<8x128xf32>
    %5 = arith.addf %2, %4 : vector<8x128xf32>
    %cst_5 = arith.constant dense<0.000000e+00> : vector<8xf32>
    %6 = vector.multi_reduction <add>, %5, %cst_5 [1] : vector<8x128xf32> to vector<8xf32>
    %7 = vector.shape_cast %6 : vector<8xf32> to vector<8x1xf32>
    %cst_6 = arith.constant 3.125000e-02 : f32
    %8 = vector.broadcast %cst_6 : f32 to vector<8x1xf32>
    %9 = arith.mulf %7, %8 : vector<8x1xf32>
    %10 = vector.broadcast %9 : vector<8x1xf32> to vector<8x128xf32>
    %11 = arith.subf %5, %10 : vector<8x128xf32>
    %12 = tpu.iota {dimensions = array<i32: 1>} : vector<8x128xi32>
    %c32_i32 = arith.constant 32 : i32
    %13 = vector.broadcast %c32_i32 : i32 to vector<8x128xi32>
    %14 = arith.cmpi slt, %12, %13 : vector<8x128xi32>
    %cst_7 = arith.constant 0.000000e+00 : f32
    %15 = vector.broadcast %cst_7 : f32 to vector<8x128xf32>
    %16 = arith.select %14, %11, %15 : vector<8x128xi1>, vector<8x128xf32>
    %17 = arith.mulf %16, %16 : vector<8x128xf32>
    %cst_8 = arith.constant dense<0.000000e+00> : vector<8xf32>
    %18 = vector.multi_reduction <add>, %17, %cst_8 [1] : vector<8x128xf32> to vector<8xf32>
    %19 = vector.shape_cast %18 : vector<8xf32> to vector<8x1xf32>
    %cst_9 = arith.constant 3.125000e-02 : f32
    %20 = vector.broadcast %cst_9 : f32 to vector<8x1xf32>
    %21 = arith.mulf %19, %20 : vector<8x1xf32>
    %cst_10 = arith.constant 9.99999974E-6 : f32
    %22 = vector.broadcast %cst_10 : f32 to vector<8x1xf32>
    %23 = arith.addf %21, %22 : vector<8x1xf32>
    %24 = math.rsqrt %23 : vector<8x1xf32>
    %25 = vector.broadcast %24 : vector<8x1xf32> to vector<8x128xf32>
    %26 = arith.mulf %16, %25 : vector<8x128xf32>
    %c1 = arith.constant 1 : index
    %c0_11 = arith.constant 0 : index
    %27 = vector.load %arg3[%c1, %c0_11] : memref<8x128xf32, #tpu.memory_space<vmem>>, vector<1x128xf32>
    %28 = vector.broadcast %27 : vector<1x128xf32> to vector<8x128xf32>
    %29 = arith.mulf %26, %28 : vector<8x128xf32>
    %c2 = arith.constant 2 : index
    %c0_12 = arith.constant 0 : index
    %30 = vector.load %arg3[%c2, %c0_12] : memref<8x128xf32, #tpu.memory_space<vmem>>, vector<1x128xf32>
    %31 = vector.broadcast %30 : vector<1x128xf32> to vector<8x128xf32>
    %32 = arith.addf %29, %31 : vector<8x128xf32>
    %33 = arith.negf %32 : vector<8x128xf32>
    %34 = math.exp %33 : vector<8x128xf32>
    %cst_13 = arith.constant 1.000000e+00 : f32
    %35 = vector.broadcast %cst_13 : f32 to vector<8x128xf32>
    %36 = arith.addf %35, %34 : vector<8x128xf32>
    %37 = arith.divf %35, %36 : vector<8x128xf32>
    %38 = arith.mulf %32, %37 : vector<8x128xf32>
    %c0_14 = arith.constant 0 : index
    %c0_15 = arith.constant 0 : index
    %39 = vector.load %arg1[%c0_14, %c0_15] : memref<8x128xf32, #tpu.memory_space<vmem>>, vector<8x128xf32>
    %40 = arith.addf %39, %38 : vector<8x128xf32>
    %c0_16 = arith.constant 0 : index
    %c0_17 = arith.constant 0 : index
    %41 = vector.load %arg4[%c0_16, %c0_17] : memref<8x128xf32, #tpu.memory_space<vmem>>, vector<8x128xf32>
    tpu.vector_store %arg4[%c0_16, %c0_17], %40 {strides = array<i32>} : memref<8x128xf32, #tpu.memory_space<vmem>>, vector<8x128xf32>,
    return
  }
  func.func @transform_0(%arg0: i32) -> (i32, i32) {
    %c0_i32 = arith.constant 0 : i32
    %c0_i32_0 = arith.constant 0 : i32
    return %arg0, %c0_i32 : i32, i32
  }
  func.func @transform_1(%arg0: i32) -> (i32, i32) {
    %c0_i32 = arith.constant 0 : i32
    %c0_i32_0 = arith.constant 0 : i32
    %c0_i32_1 = arith.constant 0 : i32
    return %c0_i32, %c0_i32_0 : i32, i32
  }
  func.func @transform_2(%arg0: i32) -> (i32, i32) {
    %c0_i32 = arith.constant 0 : i32
    %c0_i32_0 = arith.constant 0 : i32
    %c0_i32_1 = arith.constant 0 : i32
    return %c0_i32, %c0_i32_0 : i32, i32
  }
  func.func @transform_3(%arg0: i32) -> (i32, i32) {
    %c0_i32 = arith.constant 0 : i32
    %c0_i32_0 = arith.constant 0 : i32
    return %arg0, %c0_i32 : i32, i32
  }
}

</mosaic_0001>

<llo_original>
// kernel: tpu_custom_call.1
$region0: #{tpu_custom_call.1}
  #allocation0 [shape = 'u32[]', space=smem, size = 0x4, offset = 0x4, fixed_abs, tag = 'smem constant byte address 0x4 - core index']
  #allocation1 [shape = 'u32[144,128]{1,0:T(1,128)}', space=vmem, size = 0x12000, scoped, tag = 'internal scratch']
  %s0 = inlined_call_operand.hbm [shape: f32[8,128], index: 0, kind: input, shape index: {}]
  %s1 = inlined_call_operand.hbm [shape: f32[128,128], index: 1, kind: input, shape index: {}]
  %s2 = inlined_call_operand.hbm [shape: f32[8,128], index: 2, kind: input, shape index: {}]
  %s3 = inlined_call_operand.hbm [shape: f32[8,128], index: 3, kind: output, shape index: {}]
  %s4 = sld [smem:[#allocation0]]
  $region34: #{tpu_custom_call.1} parent=0
    _
  %s6 = ssub.s32 1, %s4
  %s7 = scalar_select 0, %s6, %s4
  $region1: #{tpu_custom_call.1} parent=0
    #allocation2 [shape = 'u8[4096]{0}', space=vmem, size = 0x1000, scoped, tag = 'input window, operand 0, single buffered']
    #allocation3 [shape = 's32[1]{0}', space=sflag, size = 0x4, scoped, tag = 'scoped memory for tpu_custom_call.1']
    #allocation4 [shape = 's32[1]{0}', space=sflag, size = 0x4, scoped, tag = 'scoped memory for tpu_custom_call.1']
    #allocation5 [shape = 'u8[65536]{0}', space=vmem, size = 0x10000, scoped, tag = 'input window, operand 1, single buffered']
    #allocation6 [shape = 's32[1]{0}', space=sflag, size = 0x4, scoped, tag = 'scoped memory for tpu_custom_call.1']
    #allocation7 [shape = 'u8[4096]{0}', space=vmem, size = 0x1000, scoped, tag = 'input window, operand 2, single buffered']
    #allocation8 [shape = 'u8[4096]{0}', space=vmem, size = 0x1000, scoped, tag = 'output window, operand 0, single buffered']
    %8 = vsyncpa [#allocation3], 0
    %9 = vsyncpa [#allocation6], 0
    %10 = vsyncpa [#allocation4], 0
    // Predicated region
    $region2: #{tpu_custom_call.1} parent=1 // pred_check
      _
    $region3: #{tpu_custom_call.1} parent=1 // pred_check_branch
      %12 = sbr.rel (0) target = $region5
    $region4: #{tpu_custom_call.1} parent=1 // pred_region
      %s14 = ssub.s32 128, 128
      %15 = vsyncadd [#allocation3], %s14
      %s17 = sshll.u32 [#allocation2], 4
      %s18 = int_to_ptr.vmem [resolvable:$true] %s17
      %20 = dma.hbm_to_vmem [thread:$0]  %s0, 128, %s18, [#allocation3]
    $region5: #{tpu_custom_call.1} parent=1 // pred_fallthru
      _
    // Predicated region
    $region6: #{tpu_custom_call.1} parent=1 // pred_check
      _
    $region7: #{tpu_custom_call.1} parent=1 // pred_check_branch
      %22 = sbr.rel (0) target = $region9
    $region8: #{tpu_custom_call.1} parent=1 // pred_region
      %s24 = ssub.s32 2048, 2048
      %25 = vsyncadd [#allocation6], %s24
      %s26 = sshll.u32 [#allocation5], 4
      %s27 = int_to_ptr.vmem [resolvable:$true] %s26
      %32 = dma.hbm_to_vmem [thread:$0]  %s1, 2048, %s27, [#allocation6], 128, 128, 8
    $region9: #{tpu_custom_call.1} parent=1 // pred_fallthru
      _
    // Predicated region
    $region10: #{tpu_custom_call.1} parent=1 // pred_check
      _
    $region11: #{tpu_custom_call.1} parent=1 // pred_check_branch
      %34 = sbr.rel (0) target = $region13
    $region12: #{tpu_custom_call.1} parent=1 // pred_region
      %s36 = ssub.s32 128, 128
      %37 = vsyncadd [#allocation6], %s36
      %s39 = sshll.u32 [#allocation7], 4
      %s40 = int_to_ptr.vmem [resolvable:$true] %s39
      %42 = dma.hbm_to_vmem [thread:$0]  %s2, 128, %s40, [#allocation6]
    $region13: #{tpu_custom_call.1} parent=1 // pred_fallthru
      _
    // Predicated region
    $region14: #{tpu_custom_call.1} parent=1 // pred_check
      _
    $region15: #{tpu_custom_call.1} parent=1 // pred_check_branch
      %44 = sbr.rel (0) target = $region17
    $region16: #{tpu_custom_call.1} parent=1 // pred_region
      %45 = dma.done [#allocation3], 128
    $region17: #{tpu_custom_call.1} parent=1 // pred_fallthru
      _
    // Predicated region
    $region18: #{tpu_custom_call.1} parent=1 // pred_check
      _
    $region19: #{tpu_custom_call.1} parent=1 // pred_check_branch
      %47 = sbr.rel (0) target = $region21
    $region20: #{tpu_custom_call.1} parent=1 // pred_region
      %48 = dma.done [#allocation6], 2048
    $region21: #{tpu_custom_call.1} parent=1 // pred_fallthru
      _
    // Predicated region
    $region22: #{tpu_custom_call.1} parent=1 // pred_check
      _
    $region23: #{tpu_custom_call.1} parent=1 // pred_check_branch
      %50 = sbr.rel (0) target = $region25
    $region24: #{tpu_custom_call.1} parent=1 // pred_region
      %51 = dma.done [#allocation6], 128
    $region25: #{tpu_custom_call.1} parent=1 // pred_fallthru
      _
    %v52 = vld [vmem:[#allocation2] sm:$0xff]
    %v53 = vld [vmem:[#allocation5] sm:$0xff]
    %v54 = vld [vmem:[#allocation5 + $0x8] sm:$0xff]
    %v55 = vld [vmem:[#allocation5 + $0x10] sm:$0xff]
    %v56 = vld [vmem:[#allocation5 + $0x18] sm:$0xff]
    %v57 = vld [vmem:[#allocation5 + $0x20] sm:$0xff]
    %v58 = vld [vmem:[#allocation5 + $0x28] sm:$0xff]
    %v59 = vld [vmem:[#allocation5 + $0x30] sm:$0xff]
    %v60 = vld [vmem:[#allocation5 + $0x38] sm:$0xff]
    %v61 = vld [vmem:[#allocation5 + $0x40] sm:$0xff]
    %v62 = vld [vmem:[#allocation5 + $0x48] sm:$0xff]
    %v63 = vld [vmem:[#allocation5 + $0x50] sm:$0xff]
    %v64 = vld [vmem:[#allocation5 + $0x58] sm:$0xff]
    %v65 = vld [vmem:[#allocation5 + $0x60] sm:$0xff]
    %v66 = vld [vmem:[#allocation5 + $0x68] sm:$0xff]
    %v67 = vld [vmem:[#allocation5 + $0x70] sm:$0xff]
    %v68 = vld [vmem:[#allocation5 + $0x78] sm:$0xff]
    %v69 = vld [vmem:[#allocation7] sm:$0x1]
    %v70 = vlaneseq
    %v71 = vshrl.u32 %v70, 7
    %v72 = vsub.s32 0, %v71
    %v73 = vrot.slane %v69, %v72
    %74 = vmatprep.subr.mxu0 0.0
    %75 = vmatpush1.msra.mxu0 %v53
    %76 = vmatprep.subr.mxu0 0.0
    %77 = vmatpush1.msra.mxu0 %v54
    %78 = vmatprep.subr.mxu0 0.0
    %79 = vmatpush1.msra.mxu0 %v55
    %80 = vmatprep.subr.mxu0 0.0
    %81 = vmatpush1.msra.mxu0 %v56
    %82 = vmatprep.subr.mxu0 0.0
    %83 = vmatpush1.msra.mxu0 %v57
    %84 = vmatprep.subr.mxu0 0.0
    %85 = vmatpush1.msra.mxu0 %v58
    %86 = vmatprep.subr.mxu0 0.0
    %87 = vmatpush1.msra.mxu0 %v59
    %88 = vmatprep.subr.mxu0 0.0
    %89 = vmatpush1.msra.mxu0 %v60
    %90 = vmatprep.subr.mxu0 0.0
    %91 = vmatpush1.msra.mxu0 %v61
    %92 = vmatprep.subr.mxu0 0.0
    %93 = vmatpush1.msra.mxu0 %v62
    %94 = vmatprep.subr.mxu0 0.0
    %95 = vmatpush1.msra.mxu0 %v63
    %96 = vmatprep.subr.mxu0 0.0
    %97 = vmatpush1.msra.mxu0 %v64
    %98 = vmatprep.subr.mxu0 0.0
    %99 = vmatpush1.msra.mxu0 %v65
    %100 = vmatprep.subr.mxu0 0.0
    %101 = vmatpush1.msra.mxu0 %v66
    %102 = vmatprep.subr.mxu0 0.0
    %103 = vmatpush1.msra.mxu0 %v67
    %104 = vmatprep.subr.mxu0 0.0
    %105 = vmatpush1.msra.mxu0 %v68
    %106 = vmatprep.subr.mxu0 0.0
    %107 = vmatpush1.msra.mxu0 0.0
    %108 = vmatprep.subr.mxu0 0.0
    %109 = vmatpush1.msra.mxu0 0.0
    %110 = vmatprep.subr.mxu0 0.0
    %111 = vmatpush1.msra.mxu0 0.0
    %112 = vmatprep.subr.mxu0 0.0
    %113 = vmatpush1.msra.mxu0 0.0
    %114 = vmatprep.subr.mxu0 0.0
    %115 = vmatpush1.msra.mxu0 0.0
    %116 = vmatprep.subr.mxu0 0.0
    %117 = vmatpush1.msra.mxu0 0.0
    %118 = vmatprep.subr.mxu0 0.0
    %119 = vmatpush1.msra.mxu0 0.0
    %120 = vmatprep.subr.mxu0 0.0
    %121 = vmatpush1.msra.mxu0 0.0
    %122 = vmatprep.subr.mxu0 0.0
    %123 = vmatpush1.msra.mxu0 0.0
    %124 = vmatprep.subr.mxu0 0.0
    %125 = vmatpush1.msra.mxu0 0.0
    %126 = vmatprep.subr.mxu0 0.0
    %127 = vmatpush1.msra.mxu0 0.0
    %128 = vmatprep.subr.mxu0 0.0
    %129 = vmatpush1.msra.mxu0 0.0
    %130 = vmatprep.subr.mxu0 0.0
    %131 = vmatpush1.msra.mxu0 0.0
    %132 = vmatprep.subr.mxu0 0.0
    %133 = vmatpush1.msra.mxu0 0.0
    %134 = vmatprep.subr.mxu0 0.0
    %135 = vmatpush1.msra.mxu0 0.0
    %136 = vmatprep.subr.mxu0 0.0
    %137 = vmatpush1.msra.mxu0 0.0
    %138 = vmatprep.mubr.f32.mxu0 0.0
    %139 = vmatmul.mubr.f32.gmra.mrb[0].mxu0 %v52
    %v140 = vpop.f32.mrb[0].mxu0
    %v141 = vadd.f32 %v73, %v140
    %v142 = vpop.f32.mrb[0].mxu0
    %143 = vdwg.mxu0
    %144 = vadd.xlane.f32.xlu0 %v141
    %v145 = vpop.xlane.xlu0 %144
    %v146 = vmul.f32 %v145, 0.03125
    %v147 = vsub.f32 %v141, %v146
    %v148 = vlaneseq
    %v149 = vand.u32 %v148, 127
    %vm150 = vcmp.lt.s32.totalorder %v149, 32
    %v151 = vsel %vm150, %v147, 0.0
    %v152 = vmul.f32 %v151, %v151
    %153 = vadd.xlane.f32.xlu0 %v152
    %v154 = vpop.xlane.xlu0 %153
    %v155 = vmul.f32 %v154, 0.03125
    %v156 = vadd.f32 %v155, 1e-05
    %v157 = vrsqrt.pop %v156
    %v158 = vmul.f32 %v151, %v157
    %v159 = vld [vmem:[#allocation7 + $0x1] sm:$0x1]
    %v160 = vlaneseq
    %v161 = vshrl.u32 %v160, 7
    %v162 = vsub.s32 0, %v161
    %v163 = vrot.slane %v159, %v162
    %v164 = vmul.f32 %v158, %v163
    %v165 = vld [vmem:[#allocation7 + $0x2] sm:$0x1]
    %v166 = vlaneseq
    %v167 = vshrl.u32 %v166, 7
    %v168 = vsub.s32 0, %v167
    %v169 = vrot.slane %v165, %v168
    %v170 = vadd.f32 %v164, %v169
    %v171 = vxor.u32 %v170, 2147483648
    %v172 = vmul.f32 %v171, 1.442695
    %v173 = vpow.pop %v172
    %v174 = vadd.f32 %v173, 1.0
    %v175 = vrcp.pop %v174
    %v176 = vmul.f32 1.0, %v175
    %v177 = vmul.f32 %v170, %v176
    %v178 = vadd.f32 %v52, %v177
    %179 = vst [vmem:[#allocation8] sm:$0xff] %v178
    // Predicated region
    $region26: #{tpu_custom_call.1} parent=1 // pred_check
      _
    $region27: #{tpu_custom_call.1} parent=1 // pred_check_branch
      %181 = sbr.rel (0) target = $region29
    $region28: #{tpu_custom_call.1} parent=1 // pred_region
      %s183 = ssub.s32 128, 128
      %184 = vsyncadd [#allocation4], %s183
      %s186 = sshll.u32 [#allocation8], 4
      %s187 = int_to_ptr.vmem [resolvable:$true] %s186
      %189 = dma.vmem_to_hbm [thread:$0]  %s187, 128, %s3, [#allocation4]
    $region29: #{tpu_custom_call.1} parent=1 // pred_fallthru
      _
    // Predicated region
    $region30: #{tpu_custom_call.1} parent=1 // pred_check
      _
    $region31: #{tpu_custom_call.1} parent=1 // pred_check_branch
      %191 = sbr.rel (0) target = $region33
    $region32: #{tpu_custom_call.1} parent=1 // pred_region
      %192 = dma.done [#allocation4], 128
    $region33: #{tpu_custom_call.1} parent=1 // pred_fallthru
      _
    %193 = vsyncpa [#allocation3], 1
    %194 = vsyncpa [#allocation6], 1
    %195 = vsyncpa [#allocation4], 1

// kernel: tpu_custom_call.1
$region0: #{tpu_custom_call.1}
  #allocation0 [shape = 'u32[]', space=smem, size = 0x4, offset = 0x4, fixed_abs, tag = 'smem constant byte address 0x4 - core index']
  #allocation1 [shape = 'u32[144,128]{1,0:T(1,128)}', space=vmem, size = 0x12000, scoped, tag = 'internal scratch']
  %s0 = inlined_call_operand.hbm [shape: f32[8,128], index: 0, kind: input, shape index: {}]
  %s1 = inlined_call_operand.hbm [shape: f32[128,128], index: 1, kind: input, shape index: {}]
  %s2 = inlined_call_operand.hbm [shape: f32[8,128], index: 2, kind: input, shape index: {}]
  %s3 = inlined_call_operand.hbm [shape: f32[8,128], index: 3, kind: output, shape index: {}]
  %s4 = sld [smem:[#allocation0]]
  $region34: #{tpu_custom_call.1} parent=0
    _
  %s6 = ssub.s32 1, %s4
  %s7 = scalar_select 0, %s6, %s4
  $region1: #{tpu_custom_call.1} parent=0
    #allocation2 [shape = 'u8[4096]{0}', space=vmem, size = 0x1000, scoped, tag = 'input window, operand 0, single buffered']
    #allocation3 [shape = 's32[1]{0}', space=sflag, size = 0x4, scoped, tag = 'scoped memory for tpu_custom_call.1']
    #allocation4 [shape = 's32[1]{0}', space=sflag, size = 0x4, scoped, tag = 'scoped memory for tpu_custom_call.1']
    #allocation5 [shape = 'u8[65536]{0}', space=vmem, size = 0x10000, scoped, tag = 'input window, operand 1, single buffered']
    #allocation6 [shape = 's32[1]{0}', space=sflag, size = 0x4, scoped, tag = 'scoped memory for tpu_custom_call.1']
    #allocation7 [shape = 'u8[4096]{0}', space=vmem, size = 0x1000, scoped, tag = 'input window, operand 2, single buffered']
    #allocation8 [shape = 'u8[4096]{0}', space=vmem, size = 0x1000, scoped, tag = 'output window, operand 0, single buffered']
    %8 = vsyncpa [#allocation3], 0
    %9 = vsyncpa [#allocation6], 0
    %10 = vsyncpa [#allocation4], 0
    // Predicated region
    $region2: #{tpu_custom_call.1} parent=1 // pred_check
      _
    $region3: #{tpu_custom_call.1} parent=1 // pred_check_branch
      %12 = sbr.rel (0) target = $region5
    $region4: #{tpu_custom_call.1} parent=1 // pred_region
      %s14 = ssub.s32 128, 128
      %15 = vsyncadd [#allocation3], %s14
      %s17 = sshll.u32 [#allocation2], 4
      %s18 = int_to_ptr.vmem [resolvable:$true] %s17
      %20 = dma.hbm_to_vmem [thread:$0]  %s0, 128, %s18, [#allocation3]
    $region5: #{tpu_custom_call.1} parent=1 // pred_fallthru
      _
    // Predicated region
    $region6: #{tpu_custom_call.1} parent=1 // pred_check
      _
    $region7: #{tpu_custom_call.1} parent=1 // pred_check_branch
      %22 = sbr.rel (0) target = $region9
    $region8: #{tpu_custom_call.1} parent=1 // pred_region
      %s24 = ssub.s32 2048, 2048
      %25 = vsyncadd [#allocation6], %s24
      %s26 = sshll.u32 [#allocation5], 4
      %s27 = int_to_ptr.vmem [resolvable:$true] %s26
      %32 = dma.hbm_to_vmem [thread:$0]  %s1, 2048, %s27, [#allocation6], 128, 128, 8
    $region9: #{tpu_custom_call.1} parent=1 // pred_fallthru
      _
    // Predicated region
    $region10: #{tpu_custom_call.1} parent=1 // pred_check
      _
    $region11: #{tpu_custom_call.1} parent=1 // pred_check_branch
      %34 = sbr.rel (0) target = $region13
    $region12: #{tpu_custom_call.1} parent=1 // pred_region
      %s36 = ssub.s32 128, 128
      %37 = vsyncadd [#allocation6], %s36
      %s39 = sshll.u32 [#allocation7], 4
      %s40 = int_to_ptr.vmem [resolvable:$true] %s39
      %42 = dma.hbm_to_vmem [thread:$0]  %s2, 128, %s40, [#allocation6]
    $region13: #{tpu_custom_call.1} parent=1 // pred_fallthru
      _
    // Predicated region
    $region14: #{tpu_custom_call.1} parent=1 // pred_check
      _
    $region15: #{tpu_custom_call.1} parent=1 // pred_check_branch
      %44 = sbr.rel (0) target = $region17
    $region16: #{tpu_custom_call.1} parent=1 // pred_region
      %45 = dma.done [#allocation3], 128
    $region17: #{tpu_custom_call.1} parent=1 // pred_fallthru
      _
    // Predicated region
    $region18: #{tpu_custom_call.1} parent=1 // pred_check
      _
    $region19: #{tpu_custom_call.1} parent=1 // pred_check_branch
      %47 = sbr.rel (0) target = $region21
    $region20: #{tpu_custom_call.1} parent=1 // pred_region
      %48 = dma.done [#allocation6], 2048
    $region21: #{tpu_custom_call.1} parent=1 // pred_fallthru
      _
    // Predicated region
    $region22: #{tpu_custom_call.1} parent=1 // pred_check
      _
    $region23: #{tpu_custom_call.1} parent=1 // pred_check_branch
      %50 = sbr.rel (0) target = $region25
    $region24: #{tpu_custom_call.1} parent=1 // pred_region
      %51 = dma.done [#allocation6], 128
    $region25: #{tpu_custom_call.1} parent=1 // pred_fallthru
      _
    %v52 = vld [vmem:[#allocation2] sm:$0xff]
    %v53 = vld [vmem:[#allocation5] sm:$0xff]
    %v54 = vld [vmem:[#allocation5 + $0x8] sm:$0xff]
    %v55 = vld [vmem:[#allocation5 + $0x10] sm:$0xff]
    %v56 = vld [vmem:[#allocation5 + $0x18] sm:$0xff]
    %v57 = vld [vmem:[#allocation5 + $0x20] sm:$0xff]
    %v58 = vld [vmem:[#allocation5 + $0x28] sm:$0xff]
    %v59 = vld [vmem:[#allocation5 + $0x30] sm:$0xff]
    %v60 = vld [vmem:[#allocation5 + $0x38] sm:$0xff]
    %v61 = vld [vmem:[#allocation5 + $0x40] sm:$0xff]
    %v62 = vld [vmem:[#allocation5 + $0x48] sm:$0xff]
    %v63 = vld [vmem:[#allocation5 + $0x50] sm:$0xff]
    %v64 = vld [vmem:[#allocation5 + $0x58] sm:$0xff]
    %v65 = vld [vmem:[#allocation5 + $0x60] sm:$0xff]
    %v66 = vld [vmem:[#allocation5 + $0x68] sm:$0xff]
    %v67 = vld [vmem:[#allocation5 + $0x70] sm:$0xff]
    %v68 = vld [vmem:[#allocation5 + $0x78] sm:$0xff]
    %v69 = vld [vmem:[#allocation7] sm:$0x1]
    %v70 = vlaneseq
    %v71 = vshrl.u32 %v70, 7
    %v72 = vsub.s32 0, %v71
    %v73 = vrot.slane %v69, %v72
    %74 = vmatprep.subr.mxu0 0.0
    %75 = vmatpush1.msra.mxu0 %v53
    %76 = vmatprep.subr.mxu0 0.0
    %77 = vmatpush1.msra.mxu0 %v54
    %78 = vmatprep.subr.mxu0 0.0
    %79 = vmatpush1.msra.mxu0 %v55
    %80 = vmatprep.subr.mxu0 0.0
    %81 = vmatpush1.msra.mxu0 %v56
    %82 = vmatprep.subr.mxu0 0.0
    %83 = vmatpush1.msra.mxu0 %v57
    %84 = vmatprep.subr.mxu0 0.0
    %85 = vmatpush1.msra.mxu0 %v58
    %86 = vmatprep.subr.mxu0 0.0
    %87 = vmatpush1.msra.mxu0 %v59
    %88 = vmatprep.subr.mxu0 0.0
    %89 = vmatpush1.msra.mxu0 %v60
    %90 = vmatprep.subr.mxu0 0.0
    %91 = vmatpush1.msra.mxu0 %v61
    %92 = vmatprep.subr.mxu0 0.0
    %93 = vmatpush1.msra.mxu0 %v62
    %94 = vmatprep.subr.mxu0 0.0
    %95 = vmatpush1.msra.mxu0 %v63
    %96 = vmatprep.subr.mxu0 0.0
    %97 = vmatpush1.msra.mxu0 %v64
    %98 = vmatprep.subr.mxu0 0.0
    %99 = vmatpush1.msra.mxu0 %v65
    %100 = vmatprep.subr.mxu0 0.0
    %101 = vmatpush1.msra.mxu0 %v66
    %102 = vmatprep.subr.mxu0 0.0
    %103 = vmatpush1.msra.mxu0 %v67
    %104 = vmatprep.subr.mxu0 0.0
    %105 = vmatpush1.msra.mxu0 %v68
    %106 = vmatprep.subr.mxu0 0.0
    %107 = vmatpush1.msra.mxu0 0.0
    %108 = vmatprep.subr.mxu0 0.0
    %109 = vmatpush1.msra.mxu0 0.0
    %110 = vmatprep.subr.mxu0 0.0
    %111 = vmatpush1.msra.mxu0 0.0
    %112 = vmatprep.subr.mxu0 0.0
    %113 = vmatpush1.msra.mxu0 0.0
    %114 = vmatprep.subr.mxu0 0.0
    %115 = vmatpush1.msra.mxu0 0.0
    %116 = vmatprep.subr.mxu0 0.0
    %117 = vmatpush1.msra.mxu0 0.0
    %118 = vmatprep.subr.mxu0 0.0
    %119 = vmatpush1.msra.mxu0 0.0
    %120 = vmatprep.subr.mxu0 0.0
    %121 = vmatpush1.msra.mxu0 0.0
    %122 = vmatprep.subr.mxu0 0.0
    %123 = vmatpush1.msra.mxu0 0.0
    %124 = vmatprep.subr.mxu0 0.0
    %125 = vmatpush1.msra.mxu0 0.0
    %126 = vmatprep.subr.mxu0 0.0
    %127 = vmatpush1.msra.mxu0 0.0
    %128 = vmatprep.subr.mxu0 0.0
    %129 = vmatpush1.msra.mxu0 0.0
    %130 = vmatprep.subr.mxu0 0.0
    %131 = vmatpush1.msra.mxu0 0.0
    %132 = vmatprep.subr.mxu0 0.0
    %133 = vmatpush1.msra.mxu0 0.0
    %134 = vmatprep.subr.mxu0 0.0
    %135 = vmatpush1.msra.mxu0 0.0
    %136 = vmatprep.subr.mxu0 0.0
    %137 = vmatpush1.msra.mxu0 0.0
    %138 = vmatprep.mubr.f32.mxu0 0.0
    %139 = vmatmul.mubr.f32.gmra.mrb[0].mxu0 %v52
    %v140 = vpop.f32.mrb[0].mxu0
    %v141 = vadd.f32 %v73, %v140
    %v142 = vpop.f32.mrb[0].mxu0
    %143 = vdwg.mxu0
    %144 = vadd.xlane.f32.xlu0 %v141
    %v145 = vpop.xlane.xlu0 %144
    %v146 = vmul.f32 %v145, 0.03125
    %v147 = vsub.f32 %v141, %v146
    %v148 = vlaneseq
    %v149 = vand.u32 %v148, 127
    %vm150 = vcmp.lt.s32.totalorder %v149, 32
    %v151 = vsel %vm150, %v147, 0.0
    %v152 = vmul.f32 %v151, %v151
    %153 = vadd.xlane.f32.xlu0 %v152
    %v154 = vpop.xlane.xlu0 %153
    %v155 = vmul.f32 %v154, 0.03125
    %v156 = vadd.f32 %v155, 1e-05
    %v157 = vrsqrt.pop %v156
    %v158 = vmul.f32 %v151, %v157
    %v159 = vld [vmem:[#allocation7 + $0x1] sm:$0x1]
    %v160 = vlaneseq
    %v161 = vshrl.u32 %v160, 7
    %v162 = vsub.s32 0, %v161
    %v163 = vrot.slane %v159, %v162
    %v164 = vmul.f32 %v158, %v163
    %v165 = vld [vmem:[#allocation7 + $0x2] sm:$0x1]
    %v166 = vlaneseq
    %v167 = vshrl.u32 %v166, 7
    %v168 = vsub.s32 0, %v167
    %v169 = vrot.slane %v165, %v168
    %v170 = vadd.f32 %v164, %v169
    %v171 = vxor.u32 %v170, 2147483648
    %v172 = vmul.f32 %v171, 1.442695
    %v173 = vpow.pop %v172
    %v174 = vadd.f32 %v173, 1.0
    %v175 = vrcp.pop %v174
    %v176 = vmul.f32 1.0, %v175
    %v177 = vmul.f32 %v170, %v176
    %v178 = vadd.f32 %v52, %v177
    %179 = vst [vmem:[#allocation8] sm:$0xff] %v178
    // Predicated region
    $region26: #{tpu_custom_call.1} parent=1 // pred_check
      _
    $region27: #{tpu_custom_call.1} parent=1 // pred_check_branch
      %181 = sbr.rel (0) target = $region29
    $region28: #{tpu_custom_call.1} parent=1 // pred_region
      %s183 = ssub.s32 128, 128
      %184 = vsyncadd [#allocation4], %s183
      %s186 = sshll.u32 [#allocation8], 4
      %s187 = int_to_ptr.vmem [resolvable:$true] %s186
      %189 = dma.vmem_to_hbm [thread:$0]  %s187, 128, %s3, [#allocation4]
    $region29: #{tpu_custom_call.1} parent=1 // pred_fallthru
      _
    // Predicated region
    $region30: #{tpu_custom_call.1} parent=1 // pred_check
      _
    $region31: #{tpu_custom_call.1} parent=1 // pred_check_branch
      %191 = sbr.rel (0) target = $region33
    $region32: #{tpu_custom_call.1} parent=1 // pred_region
      %192 = dma.done [#allocation4], 128
    $region33: #{tpu_custom_call.1} parent=1 // pred_fallthru
      _
    %193 = vsyncpa [#allocation3], 1
    %194 = vsyncpa [#allocation6], 1
    %195 = vsyncpa [#allocation4], 1

</llo_original>
